<compile_context>
chip_gen: v7x
topology: tpu7x:2x2x1
jax: 0.10.0
libtpu: 0.0.40
codegen_flags: <defaults>
</compile_context>

<pallas_src>
import functools

import numpy as np
import jax
import jax.numpy as jnp
from jax import lax
from jax.experimental import pallas as pl
from jax.experimental.pallas import tpu as pltpu


# --------------------------------------------------------------------------
# TPU-generation aware compiler params
# --------------------------------------------------------------------------

def _pick_vmem_limit():
    try:
        kind = jax.devices()[0].device_kind.lower()
    except Exception:
        return None
    if "v7" in kind:
        return 48 * 1024 * 1024      # v7x: 64 MiB physical VMEM per core
    return 100 * 1024 * 1024         # v5e / v6e: 128 MiB physical VMEM


_VMEM_LIMIT = _pick_vmem_limit()


def _cparams(sem=("parallel",)):
    return pltpu.CompilerParams(dimension_semantics=sem,
                                vmem_limit_bytes=_VMEM_LIMIT)


# --------------------------------------------------------------------------
# in-kernel helpers
# --------------------------------------------------------------------------

def _shift(v, axis, delta):
    """v[i + delta] along `axis` with edge clamping (delta in {-1, +1})."""
    n = v.shape[axis]
    if n == 1:
        return v
    if delta == -1:
        head = lax.slice_in_dim(v, 0, 1, axis=axis)
        body = lax.slice_in_dim(v, 0, n - 1, axis=axis)
        return jnp.concatenate([head, body], axis=axis)
    body = lax.slice_in_dim(v, 1, n, axis=axis)
    tail = lax.slice_in_dim(v, n - 1, n, axis=axis)
    return jnp.concatenate([body, tail], axis=axis)


def _bilinear_up2(v):
    """2x bilinear upsample, half-pixel centers (align_corners=False).

    Matches nn.Upsample(scale_factor=2, mode='bilinear').  v: (H, W, C) f32.
    """
    h, w, c = v.shape
    even = 0.75 * v + 0.25 * _shift(v, 0, -1)
    odd = 0.75 * v + 0.25 * _shift(v, 0, +1)
    v = jnp.stack([even, odd], axis=1).reshape(2 * h, w, c)
    even = 0.75 * v + 0.25 * _shift(v, 1, -1)
    odd = 0.75 * v + 0.25 * _shift(v, 1, +1)
    return jnp.stack([even, odd], axis=2).reshape(2 * h, 2 * w, c)


# --------------------------------------------------------------------------
# fused [upsample] -> 3x3 same conv -> [maxpool 2x2] -> [ReLU]   (FF/FB layer)
# --------------------------------------------------------------------------

def _conv3x3_kernel(x_ref, w_ref, o_ref, xpad_ref, *, upsample, pool, relu):
    # x_ref:    (1, H, W, Cin)   NHWC activation block (one batch element)
    # w_ref:    (9*Cin, Cout)    taps packed (kh, kw, ci) row-major (bf16/f32)
    # o_ref:    (1, Ho, Wo, Cout)
    # xpad_ref: VMEM (Hc+2, Wc+2, Cin) scratch in the matmul compute dtype
    cin = x_ref.shape[3]
    cout = o_ref.shape[3]

    x = x_ref[0]
    if upsample:
        x = _bilinear_up2(x.astype(jnp.float32))
    hc, wc = x.shape[0], x.shape[1]

    # 'same' padding handled entirely in VMEM: zero the scratch, copy interior.
    xpad_ref[...] = jnp.zeros(xpad_ref.shape, xpad_ref.dtype)
    xpad_ref[1:hc + 1, 1:wc + 1, :] = x.astype(xpad_ref.dtype)

    # im2col slab -> one MXU matmul with K = 9*Cin (instead of 9 tiny matmuls).
    cols = []
    for kh in range(3):
        for kw in range(3):
            cols.append(
                xpad_ref[kh:kh + hc, kw:kw + wc, :].reshape(hc * wc, cin))
    slab = jnp.concatenate(cols, axis=-1)
    acc = jnp.dot(slab, w_ref[...], preferred_element_type=jnp.float32)

    if pool:
        # fused MaxPool2d(2, 2): contiguous reshape + max (VPU only,
        # no strided gathers).
        acc = acc.reshape(hc // 2, 2, wc // 2, 2, cout)
        acc = jnp.max(acc, axis=(1, 3))
    if relu:
        acc = jnp.maximum(acc, 0.0)
    o_ref[...] = acc.reshape(o_ref.shape).astype(o_ref.dtype)


@functools.partial(jax.jit, static_argnames=("upsample", "pool", "relu"))
def conv3x3_layer(x, w_packed, *, upsample=False, pool=False, relu=False):
    """Fused [bilinear up2] -> 3x3 same conv -> [maxpool2x2] -> [ReLU], NHWC."""
    n, h, w, cin = x.shape
    cout = w_packed.shape[1]
    hc, wc = (2 * h, 2 * w) if upsample else (h, w)
    ho, wo = (hc // 2, wc // 2) if pool else (hc, wc)
    kernel = functools.partial(_conv3x3_kernel, upsample=upsample, pool=pool,
                               relu=relu)
    return pl.pallas_call(
        kernel,
        out_shape=jax.ShapeDtypeStruct((n, ho, wo, cout), x.dtype),
        grid_spec=pltpu.PrefetchScalarGridSpec(
            num_scalar_prefetch=0,
            grid=(n,),
            in_specs=[
                pl.BlockSpec((1, h, w, cin), lambda b: (b, 0, 0, 0)),
                pl.BlockSpec((9 * cin, cout), lambda b: (0, 0)),
            ],
            out_specs=pl.BlockSpec((1, ho, wo, cout), lambda b: (b, 0, 0, 0)),
            scratch_shapes=[pltpu.VMEM((hc + 2, wc + 2, cin), w_packed.dtype)],
        ),
        compiler_params=_cparams(("parallel",)),
    )(x, w_packed)


# --------------------------------------------------------------------------
# general KxK / stride-S conv (used once: the 7x7 / stride-2 stem of features2)
# --------------------------------------------------------------------------

def _conv_stride_kernel(x_ref, w_ref, o_ref, xpad_ref, *, ksize, stride, pad,
                        relu):
    h, w, cin = x_ref.shape[1], x_ref.shape[2], x_ref.shape[3]
    ho, wo, cout = o_ref.shape[1], o_ref.shape[2], o_ref.shape[3]

    xpad_ref[...] = jnp.zeros(xpad_ref.shape, xpad_ref.dtype)
    xpad_ref[pad:pad + h, pad:pad + w, :] = x_ref[0].astype(xpad_ref.dtype)
    xp = xpad_ref[...]

    cols = []
    for kh in range(ksize):
        for kw in range(ksize):
            # strided slicing is done on a loaded VALUE (never on a Ref),
            # which is both interpreter- and Mosaic-safe.
            patch = lax.slice(
                xp, (kh, kw, 0),
                (kh + (ho - 1) * stride + 1, kw + (wo - 1) * stride + 1, cin),
                (stride, stride, 1))
            cols.append(patch.reshape(ho * wo, cin))
    slab = jnp.concatenate(cols, axis=-1)
    acc = jnp.dot(slab, w_ref[...], preferred_element_type=jnp.float32)
    if relu:
        acc = jnp.maximum(acc, 0.0)
    o_ref[...] = acc.reshape(o_ref.shape).astype(o_ref.dtype)


@functools.partial(jax.jit, static_argnames=("ksize", "stride", "pad", "relu"))
def conv_strided_layer(x, w_packed, *, ksize, stride, pad, relu=False):
    n, h, w, cin = x.shape
    cout = w_packed.shape[1]
    ho = (h + 2 * pad - ksize) // stride + 1
    wo = (w + 2 * pad - ksize) // stride + 1
    kernel = functools.partial(_conv_stride_kernel, ksize=ksize, stride=stride,
                               pad=pad, relu=relu)
    return pl.pallas_call(
        kernel,
        out_shape=jax.ShapeDtypeStruct((n, ho, wo, cout), x.dtype),
        grid_spec=pltpu.PrefetchScalarGridSpec(
            num_scalar_prefetch=0,
            grid=(n,),
            in_specs=[
                pl.BlockSpec((1, h, w, cin), lambda b: (b, 0, 0, 0)),
                pl.BlockSpec((ksize * ksize * cin, cout), lambda b: (0, 0)),
            ],
            out_specs=pl.BlockSpec((1, ho, wo, cout), lambda b: (b, 0, 0, 0)),
            scratch_shapes=[pltpu.VMEM((h + 2 * pad, w + 2 * pad, cin),
                                       w_packed.dtype)],
        ),
        compiler_params=_cparams(("parallel",)),
    )(x, w_packed)


# --------------------------------------------------------------------------
# GroupNorm(num_groups=1, C)  ==  per-sample LayerNorm over (H, W, C)
# --------------------------------------------------------------------------

def _groupnorm_kernel(x_ref, g_ref, b_ref, o_ref, *, eps):
    x = x_ref[0].astype(jnp.float32)
    mean = jnp.mean(x)
    var = jnp.mean(jnp.square(x - mean))
    y = (x - mean) * lax.rsqrt(var + eps) * g_ref[...] + b_ref[...]
    o_ref[...] = y.reshape(o_ref.shape).astype(o_ref.dtype)


@jax.jit
def groupnorm1(x, gamma, beta):
    n, h, w, c = x.shape
    return pl.pallas_call(
        functools.partial(_groupnorm_kernel, eps=1e-5),
        out_shape=jax.ShapeDtypeStruct((n, h, w, c), x.dtype),
        grid_spec=pltpu.PrefetchScalarGridSpec(
            num_scalar_prefetch=0,
            grid=(n,),
            in_specs=[
                pl.BlockSpec((1, h, w, c), lambda b: (b, 0, 0, 0)),
                pl.BlockSpec((1, c), lambda b: (0, 0)),
                pl.BlockSpec((1, c), lambda b: (0, 0)),
            ],
            out_specs=pl.BlockSpec((1, h, w, c), lambda b: (b, 0, 0, 0)),
        ),
        compiler_params=_cparams(("parallel",)),
    )(x, gamma, beta)


# --------------------------------------------------------------------------
# classifier head: global average pool + Linear, fused
# --------------------------------------------------------------------------

def _head_kernel(x_ref, w_ref, b_ref, o_ref):
    n, h, w, c = x_ref.shape
    x = x_ref[...].astype(jnp.float32).reshape(n, h * w, c)
    pooled = jnp.mean(x, axis=1)                       # (N, C)
    o_ref[...] = (jnp.dot(pooled, w_ref[...],
                          preferred_element_type=jnp.float32)
                  + b_ref[...]).astype(o_ref.dtype)


@jax.jit
def avgpool_linear(x, w, b):
    n, h, wd, c = x.shape
    ncls = w.shape[1]
    return pl.pallas_call(
        _head_kernel,
        out_shape=jax.ShapeDtypeStruct((n, ncls), jnp.float32),
        grid_spec=pltpu.PrefetchScalarGridSpec(
            num_scalar_prefetch=0,
            grid=(1,),
            in_specs=[
                pl.BlockSpec((n, h, wd, c), lambda i: (0, 0, 0, 0)),
                pl.BlockSpec((c, ncls), lambda i: (0, 0)),
                pl.BlockSpec((1, ncls), lambda i: (0, 0)),
            ],
            out_specs=pl.BlockSpec((n, ncls), lambda i: (0, 0)),
        ),
        compiler_params=_cparams(("arbitrary",)),
    )(x, w, b)


# --------------------------------------------------------------------------
# parameter helpers
# --------------------------------------------------------------------------

def _xavier_normal(key, shape):
    o, i, kh, kw = shape
    std = (2.0 / (i * kh * kw + o * kh * kw)) ** 0.5
    return std * jax.random.normal(key, shape, dtype=jnp.float32)


def _pack_conv_weight(w_oihw, dtype):
    """OIHW -> (K*K*Cin, Cout), rows ordered (kh, kw, ci) to match im2col."""
    cout, cin, kh, kw = w_oihw.shape
    return (jnp.transpose(w_oihw, (2, 3, 1, 0))
            .reshape(kh * kw * cin, cout).astype(dtype))


def _convtranspose_as_conv(w_t):
    """ConvTranspose2d weight (Cin, Cout, K, K), stride=1, pad=1 -> conv OIHW."""
    return jnp.transpose(jnp.flip(w_t, axis=(2, 3)), (1, 0, 2, 3))


# --------------------------------------------------------------------------
# PredNetImageNet_detailedOutput (forward pass only)
# --------------------------------------------------------------------------

class PredNetImageNetDetailedPallas:
    ics = [3, 64, 64, 128, 128, 128, 128, 256, 256, 256, 512, 512]
    ocs = [64, 64, 128, 128, 128, 128, 256, 256, 256, 512, 512, 512]
    sps = [False, False, True, False, True, False, True, False, False, True,
           False, False]

    def __init__(self, num_classes=1000, cls=3, *, key,
                 compute_dtype=jnp.bfloat16):
        self.cls = cls
        self.nlays = len(self.ics)
        nl = self.nlays
        keys = iter(jax.random.split(key, 4 * nl + 8))

        # baseconv (features2): 7x7 / s2 / pad 3 conv -> ReLU -> GroupNorm(1,64)
        self.w_stem = _pack_conv_weight(
            _xavier_normal(next(keys), (self.ocs[0], self.ics[0], 7, 7)),
            compute_dtype)
        self.gn_stem = (jnp.ones((1, self.ocs[0]), jnp.float32),
                        jnp.zeros((1, self.ocs[0]), jnp.float32))

        # FFconv2d / FBconv2d stacks (module index i = 1 .. nlays-1)
        self.w_ff, self.w_fb = [], []
        for i in range(1, nl):
            w_ff = _xavier_normal(next(keys), (self.ocs[i], self.ics[i], 3, 3))
            self.w_ff.append(_pack_conv_weight(w_ff, compute_dtype))
            # ConvTranspose2d(ocs[i] -> ics[i]) weight, stored in transpose
            # layout then converted to its equivalent forward-conv weight.
            w_fb = _xavier_normal(next(keys), (self.ocs[i], self.ics[i], 3, 3))
            self.w_fb.append(
                _pack_conv_weight(_convtranspose_as_conv(w_fb), compute_dtype))

        # gating parameters (ReLU'd in forward), NHWC broadcast layout
        self.a0 = [jnp.full((1, 1, 1, self.ics[i]), 0.5, jnp.float32)
                   for i in range(2, nl)]
        self.b0 = [jnp.full((1, 1, 1, self.ocs[i]), 1.0, jnp.float32)
                   for i in range(1, nl)]

        # GroupNorm(1, ocs[i]) affine parameters
        self.gn = [(jnp.ones((1, self.ocs[i]), jnp.float32),
                    jnp.zeros((1, self.ocs[i]), jnp.float32))
                   for i in range(1, nl)]

        # classifier head
        self.w_lin = 0.02 * jax.random.normal(
            next(keys), (self.ocs[-1], num_classes), jnp.float32)
        self.b_lin = jnp.zeros((1, num_classes), jnp.float32)

    # ----- layer helpers (activations are NHWC everywhere) -----
    def _ff(self, i, v, relu=False):
        return conv3x3_layer(v, self.w_ff[i], upsample=False,
                             pool=self.sps[i + 1], relu=relu)

    def _fb(self, i, v):
        return conv3x3_layer(v, self.w_fb[i], upsample=self.sps[i + 1],
                             pool=False, relu=False)

    def _gn(self, i, v):
        g, b = self.gn[i]
        return groupnorm1(v, g, b)

    def __call__(self, x_nchw):
        nl = self.nlays
        relu = jax.nn.relu
        x = jnp.transpose(x_nchw, (0, 2, 3, 1)).astype(jnp.float32)  # NHWC once

        x_ff, x_fb, x_pred, x_err = [], [], [], []
        x_ff_bg, x_fb_bg = [], []

        # baseconv = features2: GN(ReLU(conv7x7/s2))   (ReLU fused in-kernel)
        x = conv_strided_layer(x, self.w_stem, ksize=7, stride=2, pad=3,
                               relu=True)
        g0, be0 = self.gn_stem
        x = groupnorm1(x, g0, be0)

        # ---- initial feedforward sweep ----
        t0 = self._ff(0, x, relu=True)               # == F.relu(FFconv[0](x))
        xr, xr_bg = [t0], [t0]
        xr[0] = self._gn(0, xr[0])
        for i in range(1, nl - 1):
            t = self._ff(i, xr[i - 1], relu=True)
            xr.append(t)
            xr_bg.append(t)
            xr[i] = self._gn(i, xr[i])
        x_ff.append([x] + list(xr))
        x_ff_bg.append([x] + list(xr_bg))

        # ---- prediction / correction cycles ----
        for _ in range(self.cls):
            # feedback (top-down) sweep
            xp = []
            for i in range(nl - 2, 0, -1):
                xp = [self._fb(i, xr[i])] + xp
                a0 = relu(self.a0[i - 1])
                xr[i - 1] = relu(xp[0] * a0 + xr[i - 1] * (1.0 - a0))
                # NOTE: reference code reuses the *updated* xr[i-1] here.
                xr_bg[i - 1] = relu(xp[0] * a0 + xr[i - 1] * (1.0 - a0))
                xr[i - 1] = self._gn(i - 1, xr[i - 1])

            p0 = self._fb(0, xr[0])
            x_pred.append([p0] + list(xp))
            x_fb.append(list(xr))
            x_fb_bg.append(list(xr_bg))

            # feedforward (bottom-up) error-correction sweep
            xe = []
            b0 = relu(self.b0[0])
            e0 = x - p0
            xe.append(e0)
            xr[0] = relu(self._ff(0, e0) * b0 + xr[0])
            # NOTE: reference code recomputes FBconv[0]/FFconv[0] with the
            # *updated* xr[0] for the "beforeGN" bookkeeping tensor.
            xr_bg[0] = relu(self._ff(0, x - self._fb(0, xr[0])) * b0 + xr[0])
            xr[0] = self._gn(0, xr[0])
            for i in range(1, nl - 1):
                b0 = relu(self.b0[i])
                e = xr[i - 1] - xp[i - 1]
                xe.append(e)
                f = self._ff(i, e)
                xr[i] = relu(f * b0 + xr[i])
                xr_bg[i] = relu(f * b0 + xr[i])
                xr[i] = self._gn(i, xr[i])

            x_ff.append([x] + list(xr))
            x_ff_bg.append([x] + list(xr_bg))
            x_err.append(list(xe))

        out = avgpool_linear(xr[-1], self.w_lin, self.b_lin)

        # detailed outputs returned in PyTorch's NCHW convention
        to_nchw = lambda t: jnp.transpose(t, (0, 3, 1, 2))
        detailed = jax.tree_util.tree_map(
            to_nchw, (x_ff, x_fb, x_pred, x_err, x_ff_bg, x_fb_bg))
        return out, detailed


# --------------------------------------------------------------------------
# main
# --------------------------------------------------------------------------

def _conv_ref_nhwc(x_nhwc, w_oihw, stride=1, pad=1):
    x_nchw = jnp.transpose(x_nhwc, (0, 3, 1, 2))
    y = lax.conv_general_dilated(
        x_nchw, w_oihw, window_strides=(stride, stride),
        padding=((pad, pad), (pad, pad)),
        dimension_numbers=("NCHW", "OIHW", "NCHW"))
    return jnp.transpose(y, (0, 2, 3, 1))


if __name__ == "__main__":
    root = jax.random.PRNGKey(0)
    k_model, k_in, k_x, k_x3, k_w3, k_w7 = jax.random.split(root, 6)

    # ---------------- unit checks of the Pallas kernels ----------------
    N, Cin, Cout, H, W = 2, 8, 16, 8, 8
    xs = jax.random.normal(k_x, (N, H, W, Cin), jnp.float32)
    w3 = _xavier_normal(k_w3, (Cout, Cin, 3, 3))

    # (1) plain 3x3 "same" conv, f32 operands
    y = conv3x3_layer(xs, _pack_conv_weight(w3, jnp.float32))
    np.testing.assert_allclose(np.asarray(y),
                               np.asarray(_conv_ref_nhwc(xs, w3)),
                               rtol=1e-4, atol=1e-4)

    # (2) fused conv + MaxPool2d(2,2) + ReLU, bf16 matmul operands
    y = conv3x3_layer(xs, _pack_conv_weight(w3, jnp.bfloat16), pool=True,
                      relu=True)
    r = jnp.maximum(_conv_ref_nhwc(xs, w3), 0.0)
    r = r.reshape(N, H // 2, 2, W // 2, 2, Cout).max(axis=(2, 4))
    np.testing.assert_allclose(np.asarray(y), np.asarray(r),
                               rtol=3e-2, atol=3e-2)

    # (3) fused bilinear 2x upsample + conv (FBconv2d path), f32
    y = conv3x3_layer(xs, _pack_conv_weight(w3, jnp.float32), upsample=True)
    x_up = jax.image.resize(xs, (N, 2 * H, 2 * W, Cin), method="bilinear")
    np.testing.assert_allclose(np.asarray(y),
                               np.asarray(_conv_ref_nhwc(x_up, w3)),
                               rtol=1e-4, atol=1e-4)

    # (4) 7x7 / stride-2 / pad-3 stem conv (features2), f32
    x3 = jax.random.normal(k_x3, (N, 16, 16, 3), jnp.float32)
    w7 = _xavier_normal(k_w7, (32, 3, 7, 7))
    y = conv_strided_layer(x3, _pack_conv_weight(w7, jnp.float32), ksize=7,
                           stride=2, pad=3)
    np.testing.assert_allclose(
        np.asarray(y), np.asarray(_conv_ref_nhwc(x3, w7, stride=2, pad=3)),
        rtol=1e-4, atol=1e-4)

    # ----------- full PredNetImageNet_detailedOutput forward -----------
    # small spatial (32x32) and cls=1 cycle; channel stack is the real one.
    model = PredNetImageNetDetailedPallas(num_classes=10, cls=1, key=k_model)
    x = jax.random.normal(k_in, (2, 3, 32, 32), jnp.float32)
    logits, (x_ff, x_fb, x_pred, x_err, x_ff_bg, x_fb_bg) = model(x)
    logits = jax.block_until_ready(logits)
    jax.block_until_ready(x_ff[-1][-1])

    assert logits.shape == (2, 10)
    assert len(x_ff) == model.cls + 1 and len(x_ff[0]) == model.nlays
    assert len(x_fb) == model.cls and len(x_pred) == model.cls
    assert len(x_err) == model.cls and len(x_err[0]) == model.nlays - 1
    assert x_ff[0][0].shape == (2, 64, 16, 16)
    assert x_fb[0][-1].shape == (2, 512, 1, 1)
    print("KERNEL_OK")
</pallas_src>

<mosaic_0001>
module attributes {stable_mosaic.version = 11 : i64} {
  func.func @_conv3x3_kernel(%arg0: i32, %arg1: memref<1x8x8x8xf32, #tpu.memory_space<vmem>>, %arg2: memref<72x16xf32, #tpu.memory_space<vmem>>, %arg3: memref<1x8x8x16xf32, #tpu.memory_space<vmem>>, %arg4: memref<10x10x8xf32, #tpu.memory_space<vmem>>) attributes {dimension_semantics = [#tpu.dimension_semantics<parallel>], iteration_bounds = array<i64: 2>, scalar_prefetch = 0 : i64, scratch_operands = 1 : i64, tpu.core_type = #tpu.core_type<tc>, window_params = [{transform_indices = @transform_0, window_bounds = array<i64: 1, 8, 8, 8>}, {pipeline_mode = #tpu.pipeline_mode<synchronous>, transform_indices = @transform_1, window_bounds = array<i64: 72, 16>}, {transform_indices = @transform_2, window_bounds = array<i64: 1, 8, 8, 16>}]} {
    %c0 = arith.constant 0 : index
    %c0_0 = arith.constant 0 : index
    %c0_1 = arith.constant 0 : index
    %c0_2 = arith.constant 0 : index
    %0 = vector.load %arg1[%c0, %c0_0, %c0_1, %c0_2] : memref<1x8x8x8xf32, #tpu.memory_space<vmem>>, vector<1x8x8x8xf32>
    %1 = vector.shape_cast %0 : vector<1x8x8x8xf32> to vector<8x8x8xf32>
    %cst = arith.constant 0.000000e+00 : f32
    %2 = vector.broadcast %cst : f32 to vector<10x10x8xf32>
    %c0_3 = arith.constant 0 : index
    %c0_4 = arith.constant 0 : index
    %c0_5 = arith.constant 0 : index
    %3 = vector.load %arg4[%c0_3, %c0_4, %c0_5] : memref<10x10x8xf32, #tpu.memory_space<vmem>>, vector<10x10x8xf32>
    tpu.vector_store %arg4[%c0_3, %c0_4, %c0_5], %2 {strides = array<i32>} : memref<10x10x8xf32, #tpu.memory_space<vmem>>, vector<10x10x8xf32>,
    %c1 = arith.constant 1 : index
    %c1_6 = arith.constant 1 : index
    %c0_7 = arith.constant 0 : index
    %4 = vector.load %arg4[%c1, %c1_6, %c0_7] : memref<10x10x8xf32, #tpu.memory_space<vmem>>, vector<8x8x8xf32>
    tpu.vector_store %arg4[%c1, %c1_6, %c0_7], %1 {strides = array<i32>} : memref<10x10x8xf32, #tpu.memory_space<vmem>>, vector<8x8x8xf32>,
    %c0_8 = arith.constant 0 : index
    %c0_9 = arith.constant 0 : index
    %c0_10 = arith.constant 0 : index
    %5 = vector.load %arg4[%c0_8, %c0_9, %c0_10] : memref<10x10x8xf32, #tpu.memory_space<vmem>>, vector<8x8x8xf32>
    %6 = vector.shape_cast %5 : vector<8x8x8xf32> to vector<64x8xf32>
    %c0_11 = arith.constant 0 : index
    %c1_12 = arith.constant 1 : index
    %c0_13 = arith.constant 0 : index
    %7 = vector.load %arg4[%c0_11, %c1_12, %c0_13] : memref<10x10x8xf32, #tpu.memory_space<vmem>>, vector<8x8x8xf32>
    %8 = vector.shape_cast %7 : vector<8x8x8xf32> to vector<64x8xf32>
    %c0_14 = arith.constant 0 : index
    %c2 = arith.constant 2 : index
    %c0_15 = arith.constant 0 : index
    %9 = vector.load %arg4[%c0_14, %c2, %c0_15] : memref<10x10x8xf32, #tpu.memory_space<vmem>>, vector<8x8x8xf32>
    %10 = vector.shape_cast %9 : vector<8x8x8xf32> to vector<64x8xf32>
    %c1_16 = arith.constant 1 : index
    %c0_17 = arith.constant 0 : index
    %c0_18 = arith.constant 0 : index
    %11 = vector.load %arg4[%c1_16, %c0_17, %c0_18] : memref<10x10x8xf32, #tpu.memory_space<vmem>>, vector<8x8x8xf32>
    %12 = vector.shape_cast %11 : vector<8x8x8xf32> to vector<64x8xf32>
    %c1_19 = arith.constant 1 : index
    %c1_20 = arith.constant 1 : index
    %c0_21 = arith.constant 0 : index
    %13 = vector.load %arg4[%c1_19, %c1_20, %c0_21] : memref<10x10x8xf32, #tpu.memory_space<vmem>>, vector<8x8x8xf32>
    %14 = vector.shape_cast %13 : vector<8x8x8xf32> to vector<64x8xf32>
    %c1_22 = arith.constant 1 : index
    %c2_23 = arith.constant 2 : index
    %c0_24 = arith.constant 0 : index
    %15 = vector.load %arg4[%c1_22, %c2_23, %c0_24] : memref<10x10x8xf32, #tpu.memory_space<vmem>>, vector<8x8x8xf32>
    %16 = vector.shape_cast %15 : vector<8x8x8xf32> to vector<64x8xf32>
    %c2_25 = arith.constant 2 : index
    %c0_26 = arith.constant 0 : index
    %c0_27 = arith.constant 0 : index
    %17 = vector.load %arg4[%c2_25, %c0_26, %c0_27] : memref<10x10x8xf32, #tpu.memory_space<vmem>>, vector<8x8x8xf32>
    %18 = vector.shape_cast %17 : vector<8x8x8xf32> to vector<64x8xf32>
    %c2_28 = arith.constant 2 : index
    %c1_29 = arith.constant 1 : index
    %c0_30 = arith.constant 0 : index
    %19 = vector.load %arg4[%c2_28, %c1_29, %c0_30] : memref<10x10x8xf32, #tpu.memory_space<vmem>>, vector<8x8x8xf32>
    %20 = vector.shape_cast %19 : vector<8x8x8xf32> to vector<64x8xf32>
    %c2_31 = arith.constant 2 : index
    %c2_32 = arith.constant 2 : index
    %c0_33 = arith.constant 0 : index
    %21 = vector.load %arg4[%c2_31, %c2_32, %c0_33] : memref<10x10x8xf32, #tpu.memory_space<vmem>>, vector<8x8x8xf32>
    %22 = vector.shape_cast %21 : vector<8x8x8xf32> to vector<64x8xf32>
    %23 = tpu.concatenate %6, %8, %10, %12, %14, %16, %18, %20, %22 in 1 : vector<64x8xf32>, vector<64x8xf32>, vector<64x8xf32>, vector<64x8xf32>, vector<64x8xf32>, vector<64x8xf32>, vector<64x8xf32>, vector<64x8xf32>, vector<64x8xf32> -> vector<64x72xf32>
    %c0_34 = arith.constant 0 : index
    %c0_35 = arith.constant 0 : index
    %24 = vector.load %arg2[%c0_34, %c0_35] : memref<72x16xf32, #tpu.memory_space<vmem>>, vector<72x16xf32>
    %cst_36 = arith.constant dense<0.000000e+00> : vector<64x16xf32>
    %25 = tpu.matmul %23, %24, %cst_36 {dimension_numbers = #tpu.dot_dimension_numbers<[1], [0], [0], [1], [0, 0, 1, 1], [], []>} : vector<64x72xf32>, vector<72x16xf32>, vector<64x16xf32> -> vector<64x16xf32>
    %26 = vector.shape_cast %25 : vector<64x16xf32> to vector<1x8x8x16xf32>
    %c0_37 = arith.constant 0 : index
    %c0_38 = arith.constant 0 : index
    %c0_39 = arith.constant 0 : index
    %c0_40 = arith.constant 0 : index
    %27 = vector.load %arg3[%c0_37, %c0_38, %c0_39, %c0_40] : memref<1x8x8x16xf32, #tpu.memory_space<vmem>>, vector<1x8x8x16xf32>
    tpu.vector_store %arg3[%c0_37, %c0_38, %c0_39, %c0_40], %26 {strides = array<i32>} : memref<1x8x8x16xf32, #tpu.memory_space<vmem>>, vector<1x8x8x16xf32>,
    return
  }
  func.func @transform_0(%arg0: i32) -> (i32, i32, i32, i32) {
    %c0_i32 = arith.constant 0 : i32
    %c0_i32_0 = arith.constant 0 : i32
    %c0_i32_1 = arith.constant 0 : i32
    %c0_i32_2 = arith.constant 0 : i32
    return %arg0, %c0_i32, %c0_i32_0, %c0_i32_1 : i32, i32, i32, i32
  }
  func.func @transform_1(%arg0: i32) -> (i32, i32) {
    %c0_i32 = arith.constant 0 : i32
    %c0_i32_0 = arith.constant 0 : i32
    %c0_i32_1 = arith.constant 0 : i32
    return %c0_i32, %c0_i32_0 : i32, i32
  }
  func.func @transform_2(%arg0: i32) -> (i32, i32, i32, i32) {
    %c0_i32 = arith.constant 0 : i32
    %c0_i32_0 = arith.constant 0 : i32
    %c0_i32_1 = arith.constant 0 : i32
    %c0_i32_2 = arith.constant 0 : i32
    return %arg0, %c0_i32, %c0_i32_0, %c0_i32_1 : i32, i32, i32, i32
  }
}

</mosaic_0001>

<llo_original>
// kernel: conv3x3_layer.1
$region0: #{conv3x3_layer.1}
  #allocation0 [shape = 'u32[]', space=smem, size = 0x4, offset = 0x4, fixed_abs, tag = 'smem constant byte address 0x4 - core index']
  #allocation1 [shape = 'u32[144,128]{1,0:T(1,128)}', space=vmem, size = 0x12000, scoped, tag = 'internal scratch']
  #allocation2 [shape = 'f32[10,10,8]{2,1,0:T(8,128)}', space=vmem, size = 0x14000, scoped, tag = 'scratch operand']
  %s0 = inlined_call_operand.hbm [shape: f32[2,8,8,8], index: 0, kind: input, shape index: {}]
  %s1 = inlined_call_operand.hbm [shape: f32[72,16], index: 1, kind: input, shape index: {}]
  %s2 = inlined_call_operand.hbm [shape: f32[2,8,8,16], index: 2, kind: output, shape index: {}]
  %s3 = sld [smem:[#allocation0]]
  $region49: #{conv3x3_layer.1} parent=0
    _
  %s5 = ssub.s32 1, %s3
  %s6 = scalar_select 0, %s5, %s3
  $region1: #{conv3x3_layer.1} parent=0
    #allocation3 [shape = 'u8[65536]{0}', space=vmem, size = 0x10000, scoped, tag = 'input window, operand 0']
    #allocation4 [shape = 's32[2]{0}', space=sflag, size = 0x8, scoped, tag = 'scoped memory for conv3x3_layer.1']
    #allocation5 [shape = 's32[2]{0}', space=sflag, size = 0x8, scoped, tag = 'scoped memory for conv3x3_layer.1']
    #allocation6 [shape = 'u8[36864]{0}', space=vmem, size = 0x9000, scoped, tag = 'input window, operand 1, single buffered']
    #allocation7 [shape = 's32[1]{0}', space=sflag, size = 0x4, scoped, tag = 'scoped memory for conv3x3_layer.1']
    #allocation8 [shape = 'u8[65536]{0}', space=vmem, size = 0x10000, scoped, tag = 'output window, operand 0']
    %7 = vsyncpa [#allocation4], 0
    %s8 = scalar_lea.sflag [#allocation4], 1
    %9 = vsyncpa %s8, 0
    %10 = vsyncpa [#allocation7], 0
    %11 = vsyncpa [#allocation5], 0
    %s12 = scalar_lea.sflag [#allocation5], 1
    %13 = vsyncpa %s12, 0
    loop: start=0, step=1, limit=4
    $region2: #{conv3x3_layer.1} parent=1 // loop_pre_header
      _
    $region3: #{conv3x3_layer.1} parent=1 // loop_header
      %s15 = sphi 0, %s19
      %p16 = scmp.ge.s32.totalorder %s15, 4
      %s25 = sphi 0, %s27
      %s28 = sphi 0, %s25
      %s29 = sphi 0, %s28
      %s45 = sphi 0, %s29
      %s49 = sphi 0, %s49
      %s51 = sphi 0, %s49
      %s52 = sphi 0, %s51
      %s66 = sphi 0, %s52
      %s72 = sphi 0, %s74
      %s75 = sphi 0, %s72
      %s76 = sphi 0, %s75
      %s92 = sphi 0, %s76
    $region4: #{conv3x3_layer.1} parent=1 // loop_header_branch
      %18 = sbr.rel (%p16) target = $region8
    $region5: #{conv3x3_layer.1} parent=1 // loop_body
      %s20 = ssub.s32 %s15, 1
      %s21 = ssub.s32 %s15, 2
      %s22 = sadd.s32 %s15, 1
      %s23 = ssub.s32 %s15, %s22
      %p24 = scmp.eq.s32.totalorder %s23, 0
      %s26 = sadd.s32 %s25, 1
      %s27 = scalar_select %p24, %s25, %s26
      %p30 = pneg %p24
      %p31 = scmp.eq.s32.totalorder %s15, 1
      %p32 = por %p30, %p31
      %p33 = scmp.ne.s32.totalorder %s25, %s28
      %p34 = scmp.eq.s32.totalorder %s15, 0
      %p35 = por %p33, %p34
      %p36 = scmp.ne.s32.totalorder %s25, %s28
      %p37 = scmp.eq.s32.totalorder %s20, 1
      %p38 = por %p36, %p37
      %p39 = scmp.ne.s32.totalorder %s28, %s29
      %p40 = scmp.eq.s32.totalorder %s20, 0
      %p41 = por %p39, %p40
      %p42 = scmp.ne.s32.totalorder %s28, %s29
      %p43 = scmp.eq.s32.totalorder %s21, 1
      %p44 = por %p42, %p43
      %p46 = scmp.ne.s32.totalorder %s29, %s45
      %p47 = scmp.eq.s32.totalorder %s21, 0
      %p48 = por %p46, %p47
      %s50 = sadd.s32 %s49, 1
      %p53 = scmp.eq.s32.totalorder %s15, 1
      %p54 = scmp.ne.s32.totalorder %s49, %s51
      %p55 = scmp.eq.s32.totalorder %s15, 0
      %p56 = por %p54, %p55
      %p57 = scmp.ne.s32.totalorder %s49, %s51
      %p58 = scmp.eq.s32.totalorder %s20, 1
      %p59 = por %p57, %p58
      %p60 = scmp.ne.s32.totalorder %s51, %s52
      %p61 = scmp.eq.s32.totalorder %s20, 0
      %p62 = por %p60, %p61
      %p63 = scmp.ne.s32.totalorder %s51, %s52
      %p64 = scmp.eq.s32.totalorder %s21, 1
      %p65 = por %p63, %p64
      %p67 = scmp.ne.s32.totalorder %s52, %s66
      %p68 = scmp.eq.s32.totalorder %s21, 0
      %p69 = por %p67, %p68
      %s70 = ssub.s32 %s15, %s22
      %p71 = scmp.eq.s32.totalorder %s70, 0
      %s73 = sadd.s32 %s72, 1
      %s74 = scalar_select %p71, %s72, %s73
      %p77 = pneg %p71
      %p78 = scmp.eq.s32.totalorder %s15, 1
      %p79 = por %p77, %p78
      %p80 = scmp.ne.s32.totalorder %s72, %s75
      %p81 = scmp.eq.s32.totalorder %s15, 0
      %p82 = por %p80, %p81
      %p83 = scmp.ne.s32.totalorder %s72, %s75
      %p84 = scmp.eq.s32.totalorder %s20, 1
      %p85 = por %p83, %p84
      %p86 = scmp.ne.s32.totalorder %s75, %s76
      %p87 = scmp.eq.s32.totalorder %s20, 0
      %p88 = por %p86, %p87
      %p89 = scmp.ne.s32.totalorder %s75, %s76
      %p90 = scmp.eq.s32.totalorder %s21, 1
      %p91 = por %p89, %p90
      %p93 = scmp.ne.s32.totalorder %s76, %s92
      %p94 = scmp.eq.s32.totalorder %s21, 0
      %p95 = por %p93, %p94
      %p96 = scmp.le.s32.totalorder 1, %s15
      %p97 = scmp.lt.s32.totalorder %s15, 3
      %p98 = pnand %p96, %p97
      %p99 = pneg %p98
      // Predicated region
      $region9: #{conv3x3_layer.1} parent=5 // pred_check
        _
      $region10: #{conv3x3_layer.1} parent=5 // pred_check_branch
        %101 = sbr.rel (%p98) target = $region12
      $region11: #{conv3x3_layer.1} parent=5 // pred_region
        %s102 = ssub.s32 %s15, 1
        // Predicated region
        $region13: #{conv3x3_layer.1} parent=11 // pred_check
          %p103 = pneg %p62
        $region14: #{conv3x3_layer.1} parent=11 // pred_check_branch
          %105 = sbr.rel (%p103) target = $region16
        $region15: #{conv3x3_layer.1} parent=11 // pred_region
          %s107 = ssub.s32 1152, 1152
          %108 = vsyncadd [#allocation7], %s107
          %s109 = sshll.u32 [#allocation6], 4
          %s110 = int_to_ptr.vmem [resolvable:$true] %s109
          %115 = dma.hbm_to_vmem [thread:$0]  %s1, 1152, %s110, [#allocation7], 128, 128, 8
        $region16: #{conv3x3_layer.1} parent=11 // pred_fallthru
          _
      $region12: #{conv3x3_layer.1} parent=5 // pred_fallthru
        _
      %p116 = scmp.lt.s32.totalorder %s15, 2
      // Predicated region
      $region17: #{conv3x3_layer.1} parent=5 // pred_check
        %p117 = pneg %p116
      $region18: #{conv3x3_layer.1} parent=5 // pred_check_branch
        %119 = sbr.rel (%p117) target = $region20
      $region19: #{conv3x3_layer.1} parent=5 // pred_region
        // Predicated region
        $region21: #{conv3x3_layer.1} parent=19 // pred_check
          %p120 = pneg %p35
        $region22: #{conv3x3_layer.1} parent=19 // pred_check_branch
          %122 = sbr.rel (%p120) target = $region24
        $region23: #{conv3x3_layer.1} parent=19 // pred_region
          %s123 = sand.u32 %s25, 1
          %s124 = scalar_lea.sflag [#allocation4], %s123
          %s125 = sand.u32 %s25, 1
          %s126 = smul.addr %s125, 64
          %s127 = scalar_lea.vmem [#allocation3], %s126
          %s129 = ssub.s32 1024, 1024
          %130 = vsyncadd %s124, %s129
          %s131 = smul.addr %s15, 8
          %s132 = smul.addr %s131, 128
          %s133 = scalar_lea.hbm %s0, %s132
          %s134 = sshll.u32 %s127, 4
          %s135 = int_to_ptr.vmem [resolvable:$true] %s134
          %140 = dma.hbm_to_vmem [thread:$0]  %s133, 1024, %s135, %s124, 128, 128, 8
        $region24: #{conv3x3_layer.1} parent=19 // pred_fallthru
          _
      $region20: #{conv3x3_layer.1} parent=5 // pred_fallthru
        _
      %p141 = scmp.le.s32.totalorder 1, %s15
      %p142 = scmp.lt.s32.totalorder %s15, 3
      %p143 = pnand %p141, %p142
      %p144 = pneg %p143
      // Predicated region
      $region25: #{conv3x3_layer.1} parent=5 // pred_check
        _
      $region26: #{conv3x3_layer.1} parent=5 // pred_check_branch
        %146 = sbr.rel (%p143) target = $region28
      $region27: #{conv3x3_layer.1} parent=5 // pred_region
        %s147 = ssub.s32 %s15, 1
        %s148 = sand.u32 %s28, 1
        %s149 = scalar_lea.sflag [#allocation4], %s148
        %s150 = sand.u32 %s28, 1
        %s151 = smul.addr %s150, 64
        %s152 = scalar_lea.vmem [#allocation3], %s151
        // Predicated region
        $region29: #{conv3x3_layer.1} parent=27 // pred_check
          %p153 = pneg %p41
        $region30: #{conv3x3_layer.1} parent=27 // pred_check_branch
          %155 = sbr.rel (%p153) target = $region32
        $region31: #{conv3x3_layer.1} parent=27 // pred_region
          %156 = dma.done %s149, 1024
        $region32: #{conv3x3_layer.1} parent=27 // pred_fallthru
          _
        // Predicated region
        $region33: #{conv3x3_layer.1} parent=27 // pred_check
          %p157 = pneg %p62
        $region34: #{conv3x3_layer.1} parent=27 // pred_check_branch
          %159 = sbr.rel (%p157) target = $region36
        $region35: #{conv3x3_layer.1} parent=27 // pred_region
          %160 = dma.done [#allocation7], 1152
        $region36: #{conv3x3_layer.1} parent=27 // pred_fallthru
          _
        %s161 = sand.u32 %s28, 1
        %s162 = scalar_lea.sflag [#allocation4], %s161
        %s163 = sand.u32 %s28, 1
        %s164 = smul.addr %s163, 64
        %s165 = scalar_lea.vmem [#allocation3], %s164
        %p166 = pneg %p41
        %p167 = pneg %p38
        %p168 = pneg %p62
        %p169 = pneg %p59
        %p170 = pneg %p88
        %p171 = pneg %p85
        %s172 = sand.u32 %s75, 1
        %s173 = scalar_lea.sflag [#allocation5], %s172
        %s174 = sand.u32 %s75, 1
        %s175 = smul.addr %s174, 64
        %s176 = scalar_lea.vmem [#allocation8], %s175
        %v177 = vld [vmem:[%s152] sm:$0xff]
        %v178 = vld [vmem:[%s152 + $0x8] sm:$0xff]
        %v179 = vld [vmem:[%s152 + $0x10] sm:$0xff]
        %v180 = vld [vmem:[%s152 + $0x18] sm:$0xff]
        %v181 = vld [vmem:[%s152 + $0x20] sm:$0xff]
        %v182 = vld [vmem:[%s152 + $0x28] sm:$0xff]
        %v183 = vld [vmem:[%s152 + $0x30] sm:$0xff]
        %v184 = vld [vmem:[%s152 + $0x38] sm:$0xff]
        %vm185 = vcmask 64512
        %186 = vst.msk [vmem:[#allocation2] sm:$0xff] %vm185, 0.0
        %vm187 = vcmask 58368
        %188 = vst.msk [vmem:[#allocation2 + $0x8] sm:$0x3] %vm187, 0.0
        %189 = vst.msk [vmem:[#allocation2 + $0x10] sm:$0xff] %vm185, 0.0
        %190 = vst.msk [vmem:[#allocation2 + $0x18] sm:$0x3] %vm187, 0.0
        %191 = vst.msk [vmem:[#allocation2 + $0x20] sm:$0xff] %vm185, 0.0
        %192 = vst.msk [vmem:[#allocation2 + $0x28] sm:$0x3] %vm187, 0.0
        %193 = vst.msk [vmem:[#allocation2 + $0x30] sm:$0xff] %vm185, 0.0
        %194 = vst.msk [vmem:[#allocation2 + $0x38] sm:$0x3] %vm187, 0.0
        %195 = vst.msk [vmem:[#allocation2 + $0x40] sm:$0xff] %vm185, 0.0
        %196 = vst.msk [vmem:[#allocation2 + $0x48] sm:$0x3] %vm187, 0.0
        %197 = vst.msk [vmem:[#allocation2 + $0x50] sm:$0xff] %vm185, 0.0
        %198 = vst.msk [vmem:[#allocation2 + $0x58] sm:$0x3] %vm187, 0.0
        %199 = vst.msk [vmem:[#allocation2 + $0x60] sm:$0xff] %vm185, 0.0
        %200 = vst.msk [vmem:[#allocation2 + $0x68] sm:$0x3] %vm187, 0.0
        %201 = vst.msk [vmem:[#allocation2 + $0x70] sm:$0xff] %vm185, 0.0
        %202 = vst.msk [vmem:[#allocation2 + $0x78] sm:$0x3] %vm187, 0.0
        %203 = vst.msk [vmem:[#allocation2 + $0x80] sm:$0xff] %vm185, 0.0
        %204 = vst.msk [vmem:[#allocation2 + $0x88] sm:$0x3] %vm187, 0.0
        %205 = vst.msk [vmem:[#allocation2 + $0x90] sm:$0xff] %vm185, 0.0
        %206 = vst.msk [vmem:[#allocation2 + $0x98] sm:$0x3] %vm187, 0.0
        %s207 = scalar_lea.vmem [#allocation2], 16
        %208 = vst.msk [vmem:[%s207 + $0x1] sm:$0xff] %vm185, %v177
        %209 = vst.msk [vmem:[%s207 + $0x11] sm:$0xff] %vm185, %v178
        %210 = vst.msk [vmem:[%s207 + $0x21] sm:$0xff] %vm185, %v179
        %211 = vst.msk [vmem:[%s207 + $0x31] sm:$0xff] %vm185, %v180
        %212 = vst.msk [vmem:[%s207 + $0x41] sm:$0xff] %vm185, %v181
        %213 = vst.msk [vmem:[%s207 + $0x51] sm:$0xff] %vm185, %v182
        %214 = vst.msk [vmem:[%s207 + $0x61] sm:$0xff] %vm185, %v183
        %215 = vst.msk [vmem:[%s207 + $0x71] sm:$0xff] %vm185, %v184
        %v216 = vld [vmem:[#allocation2] sm:$0xff]
        %v217 = vld [vmem:[#allocation2 + $0x10] sm:$0xff]
        %v218 = vld [vmem:[#allocation2 + $0x20] sm:$0xff]
        %v219 = vld [vmem:[#allocation2 + $0x30] sm:$0xff]
        %v220 = vld [vmem:[#allocation2 + $0x40] sm:$0xff]
        %v221 = vld [vmem:[#allocation2 + $0x50] sm:$0xff]
        %v222 = vld [vmem:[#allocation2 + $0x60] sm:$0xff]
        %v223 = vld [vmem:[#allocation2 + $0x70] sm:$0xff]
        %v224 = vld [vmem:[#allocation2 + $0x1] sm:$0xff]
        %v225 = vld [vmem:[#allocation2 + $0x11] sm:$0xff]
        %v226 = vld [vmem:[#allocation2 + $0x21] sm:$0xff]
        %v227 = vld [vmem:[#allocation2 + $0x31] sm:$0xff]
        %v228 = vld [vmem:[#allocation2 + $0x41] sm:$0xff]
        %v229 = vld [vmem:[#allocation2 + $0x51] sm:$0xff]
        %v230 = vld [vmem:[#allocation2 + $0x61] sm:$0xff]
        %v231 = vld [vmem:[#allocation2 + $0x71] sm:$0xff]
        %v232 = vld [vmem:[#allocation2 + $0x2] sm:$0xff]
        %v233 = vld [vmem:[#allocation2 + $0x12] sm:$0xff]
        %v234 = vld [vmem:[#allocation2 + $0x22] sm:$0xff]
        %v235 = vld [vmem:[#allocation2 + $0x32] sm:$0xff]
        %v236 = vld [vmem:[#allocation2 + $0x42] sm:$0xff]
        %v237 = vld [vmem:[#allocation2 + $0x52] sm:$0xff]
        %v238 = vld [vmem:[#allocation2 + $0x62] sm:$0xff]
        %v239 = vld [vmem:[#allocation2 + $0x72] sm:$0xff]
        %v240 = vld [vmem:[%s207] sm:$0xff]
        %v241 = vld [vmem:[%s207 + $0x10] sm:$0xff]
        %v242 = vld [vmem:[%s207 + $0x20] sm:$0xff]
        %v243 = vld [vmem:[%s207 + $0x30] sm:$0xff]
        %v244 = vld [vmem:[%s207 + $0x40] sm:$0xff]
        %v245 = vld [vmem:[%s207 + $0x50] sm:$0xff]
        %v246 = vld [vmem:[%s207 + $0x60] sm:$0xff]
        %v247 = vld [vmem:[%s207 + $0x70] sm:$0xff]
        %v248 = vld [vmem:[%s207 + $0x1] sm:$0xff]
        %v249 = vld [vmem:[%s207 + $0x11] sm:$0xff]
        %v250 = vld [vmem:[%s207 + $0x21] sm:$0xff]
        %v251 = vld [vmem:[%s207 + $0x31] sm:$0xff]
        %v252 = vld [vmem:[%s207 + $0x41] sm:$0xff]
        %v253 = vld [vmem:[%s207 + $0x51] sm:$0xff]
        %v254 = vld [vmem:[%s207 + $0x61] sm:$0xff]
        %v255 = vld [vmem:[%s207 + $0x71] sm:$0xff]
        %v256 = vld [vmem:[%s207 + $0x2] sm:$0xff]
        %v257 = vld [vmem:[%s207 + $0x12] sm:$0xff]
        %v258 = vld [vmem:[%s207 + $0x22] sm:$0xff]
        %v259 = vld [vmem:[%s207 + $0x32] sm:$0xff]
        %v260 = vld [vmem:[%s207 + $0x42] sm:$0xff]
        %v261 = vld [vmem:[%s207 + $0x52] sm:$0xff]
        %v262 = vld [vmem:[%s207 + $0x62] sm:$0xff]
        %v263 = vld [vmem:[%s207 + $0x72] sm:$0xff]
        %s264 = scalar_lea.vmem [#allocation2], 32
        %v265 = vld [vmem:[%s264] sm:$0xff]
        %v266 = vld [vmem:[%s264 + $0x10] sm:$0xff]
        %v267 = vld [vmem:[%s264 + $0x20] sm:$0xff]
        %v268 = vld [vmem:[%s264 + $0x30] sm:$0xff]
        %v269 = vld [vmem:[%s264 + $0x40] sm:$0xff]
        %v270 = vld [vmem:[%s264 + $0x50] sm:$0xff]
        %v271 = vld [vmem:[%s264 + $0x60] sm:$0xff]
        %v272 = vld [vmem:[%s264 + $0x70] sm:$0xff]
        %v273 = vld [vmem:[%s264 + $0x1] sm:$0xff]
        %v274 = vld [vmem:[%s264 + $0x11] sm:$0xff]
        %v275 = vld [vmem:[%s264 + $0x21] sm:$0xff]
        %v276 = vld [vmem:[%s264 + $0x31] sm:$0xff]
        %v277 = vld [vmem:[%s264 + $0x41] sm:$0xff]
        %v278 = vld [vmem:[%s264 + $0x51] sm:$0xff]
        %v279 = vld [vmem:[%s264 + $0x61] sm:$0xff]
        %v280 = vld [vmem:[%s264 + $0x71] sm:$0xff]
        %v281 = vld [vmem:[%s264 + $0x2] sm:$0xff]
        %v282 = vld [vmem:[%s264 + $0x12] sm:$0xff]
        %v283 = vld [vmem:[%s264 + $0x22] sm:$0xff]
        %v284 = vld [vmem:[%s264 + $0x32] sm:$0xff]
        %v285 = vld [vmem:[%s264 + $0x42] sm:$0xff]
        %v286 = vld [vmem:[%s264 + $0x52] sm:$0xff]
        %v287 = vld [vmem:[%s264 + $0x62] sm:$0xff]
        %v288 = vld [vmem:[%s264 + $0x72] sm:$0xff]
        %297 = vrot.lane.b32.xlu0 %v224, 8
        %v298 = vpop.permute.xlu0 %297
        %299 = vrot.lane.b32.xlu0 %v225, 8
        %v300 = vpop.permute.xlu0 %299
        %301 = vrot.lane.b32.xlu0 %v226, 8
        %v302 = vpop.permute.xlu0 %301
        %303 = vrot.lane.b32.xlu0 %v227, 8
        %v304 = vpop.permute.xlu0 %303
        %305 = vrot.lane.b32.xlu0 %v228, 8
        %v306 = vpop.permute.xlu0 %305
        %307 = vrot.lane.b32.xlu0 %v229, 8
        %v308 = vpop.permute.xlu0 %307
        %309 = vrot.lane.b32.xlu0 %v230, 8
        %v310 = vpop.permute.xlu0 %309
        %311 = vrot.lane.b32.xlu0 %v231, 8
        %v312 = vpop.permute.xlu0 %311
        %329 = vrot.lane.b32.xlu0 %v232, 16
        %v330 = vpop.permute.xlu0 %329
        %331 = vrot.lane.b32.xlu0 %v233, 16
        %v332 = vpop.permute.xlu0 %331
        %333 = vrot.lane.b32.xlu0 %v234, 16
        %v334 = vpop.permute.xlu0 %333
        %335 = vrot.lane.b32.xlu0 %v235, 16
        %v336 = vpop.permute.xlu0 %335
        %337 = vrot.lane.b32.xlu0 %v236, 16
        %v338 = vpop.permute.xlu0 %337
        %339 = vrot.lane.b32.xlu0 %v237, 16
        %v340 = vpop.permute.xlu0 %339
        %341 = vrot.lane.b32.xlu0 %v238, 16
        %v342 = vpop.permute.xlu0 %341
        %343 = vrot.lane.b32.xlu0 %v239, 16
        %v344 = vpop.permute.xlu0 %343
        %361 = vrot.lane.b32.xlu0 %v240, 24
        %v362 = vpop.permute.xlu0 %361
        %363 = vrot.lane.b32.xlu0 %v241, 24
        %v364 = vpop.permute.xlu0 %363
        %365 = vrot.lane.b32.xlu0 %v242, 24
        %v366 = vpop.permute.xlu0 %365
        %367 = vrot.lane.b32.xlu0 %v243, 24
        %v368 = vpop.permute.xlu0 %367
        %369 = vrot.lane.b32.xlu0 %v244, 24
        %v370 = vpop.permute.xlu0 %369
        %371 = vrot.lane.b32.xlu0 %v245, 24
        %v372 = vpop.permute.xlu0 %371
        %373 = vrot.lane.b32.xlu0 %v246, 24
        %v374 = vpop.permute.xlu0 %373
        %375 = vrot.lane.b32.xlu0 %v247, 24
        %v376 = vpop.permute.xlu0 %375
        %393 = vrot.lane.b32.xlu0 %v248, 32
        %v394 = vpop.permute.xlu0 %393
        %395 = vrot.lane.b32.xlu0 %v249, 32
        %v396 = vpop.permute.xlu0 %395
        %397 = vrot.lane.b32.xlu0 %v250, 32
        %v398 = vpop.permute.xlu0 %397
        %399 = vrot.lane.b32.xlu0 %v251, 32
        %v400 = vpop.permute.xlu0 %399
        %401 = vrot.lane.b32.xlu0 %v252, 32
        %v402 = vpop.permute.xlu0 %401
        %403 = vrot.lane.b32.xlu0 %v253, 32
        %v404 = vpop.permute.xlu0 %403
        %405 = vrot.lane.b32.xlu0 %v254, 32
        %v406 = vpop.permute.xlu0 %405
        %407 = vrot.lane.b32.xlu0 %v255, 32
        %v408 = vpop.permute.xlu0 %407
        %425 = vrot.lane.b32.xlu0 %v256, 40
        %v426 = vpop.permute.xlu0 %425
        %427 = vrot.lane.b32.xlu0 %v257, 40
        %v428 = vpop.permute.xlu0 %427
        %429 = vrot.lane.b32.xlu0 %v258, 40
        %v430 = vpop.permute.xlu0 %429
        %431 = vrot.lane.b32.xlu0 %v259, 40
        %v432 = vpop.permute.xlu0 %431
        %433 = vrot.lane.b32.xlu0 %v260, 40
        %v434 = vpop.permute.xlu0 %433
        %435 = vrot.lane.b32.xlu0 %v261, 40
        %v436 = vpop.permute.xlu0 %435
        %437 = vrot.lane.b32.xlu0 %v262, 40
        %v438 = vpop.permute.xlu0 %437
        %439 = vrot.lane.b32.xlu0 %v263, 40
        %v440 = vpop.permute.xlu0 %439
        %457 = vrot.lane.b32.xlu0 %v265, 48
        %v458 = vpop.permute.xlu0 %457
        %459 = vrot.lane.b32.xlu0 %v266, 48
        %v460 = vpop.permute.xlu0 %459
        %461 = vrot.lane.b32.xlu0 %v267, 48
        %v462 = vpop.permute.xlu0 %461
        %463 = vrot.lane.b32.xlu0 %v268, 48
        %v464 = vpop.permute.xlu0 %463
        %465 = vrot.lane.b32.xlu0 %v269, 48
        %v466 = vpop.permute.xlu0 %465
        %467 = vrot.lane.b32.xlu0 %v270, 48
        %v468 = vpop.permute.xlu0 %467
        %469 = vrot.lane.b32.xlu0 %v271, 48
        %v470 = vpop.permute.xlu0 %469
        %471 = vrot.lane.b32.xlu0 %v272, 48
        %v472 = vpop.permute.xlu0 %471
        %489 = vrot.lane.b32.xlu0 %v273, 56
        %v490 = vpop.permute.xlu0 %489
        %491 = vrot.lane.b32.xlu0 %v274, 56
        %v492 = vpop.permute.xlu0 %491
        %493 = vrot.lane.b32.xlu0 %v275, 56
        %v494 = vpop.permute.xlu0 %493
        %495 = vrot.lane.b32.xlu0 %v276, 56
        %v496 = vpop.permute.xlu0 %495
        %497 = vrot.lane.b32.xlu0 %v277, 56
        %v498 = vpop.permute.xlu0 %497
        %499 = vrot.lane.b32.xlu0 %v278, 56
        %v500 = vpop.permute.xlu0 %499
        %501 = vrot.lane.b32.xlu0 %v279, 56
        %v502 = vpop.permute.xlu0 %501
        %503 = vrot.lane.b32.xlu0 %v280, 56
        %v504 = vpop.permute.xlu0 %503
        %521 = vrot.lane.b32.xlu0 %v281, 64
        %v522 = vpop.permute.xlu0 %521
        %523 = vrot.lane.b32.xlu0 %v282, 64
        %v524 = vpop.permute.xlu0 %523
        %525 = vrot.lane.b32.xlu0 %v283, 64
        %v526 = vpop.permute.xlu0 %525
        %527 = vrot.lane.b32.xlu0 %v284, 64
        %v528 = vpop.permute.xlu0 %527
        %529 = vrot.lane.b32.xlu0 %v285, 64
        %v530 = vpop.permute.xlu0 %529
        %531 = vrot.lane.b32.xlu0 %v286, 64
        %v532 = vpop.permute.xlu0 %531
        %533 = vrot.lane.b32.xlu0 %v287, 64
        %v534 = vpop.permute.xlu0 %533
        %535 = vrot.lane.b32.xlu0 %v288, 64
        %v536 = vpop.permute.xlu0 %535
        %v545 = vsel %vm185, %v216, %v298
        %v546 = vsel %vm185, %v217, %v300
        %v547 = vsel %vm185, %v218, %v302
        %v548 = vsel %vm185, %v219, %v304
        %v549 = vsel %vm185, %v220, %v306
        %v550 = vsel %vm185, %v221, %v308
        %v551 = vsel %vm185, %v222, %v310
        %v552 = vsel %vm185, %v223, %v312
        %vm553 = vcmask 130048
        %v554 = vsel %vm553, %v545, %v330
        %v555 = vsel %vm553, %v546, %v332
        %v556 = vsel %vm553, %v547, %v334
        %v557 = vsel %vm553, %v548, %v336
        %v558 = vsel %vm553, %v549, %v338
        %v559 = vsel %vm553, %v550, %v340
        %v560 = vsel %vm553, %v551, %v342
        %v561 = vsel %vm553, %v552, %v344
        %vm562 = vcmask 195584
        %v563 = vsel %vm562, %v554, %v362
        %v564 = vsel %vm562, %v555, %v364
        %v565 = vsel %vm562, %v556, %v366
        %v566 = vsel %vm562, %v557, %v368
        %v567 = vsel %vm562, %v558, %v370
        %v568 = vsel %vm562, %v559, %v372
        %v569 = vsel %vm562, %v560, %v374
        %v570 = vsel %vm562, %v561, %v376
        %vm571 = vcmask 261120
        %v572 = vsel %vm571, %v563, %v394
        %v573 = vsel %vm571, %v564, %v396
        %v574 = vsel %vm571, %v565, %v398
        %v575 = vsel %vm571, %v566, %v400
        %v576 = vsel %vm571, %v567, %v402
        %v577 = vsel %vm571, %v568, %v404
        %v578 = vsel %vm571, %v569, %v406
        %v579 = vsel %vm571, %v570, %v408
        %vm580 = vcmask 326656
        %v581 = vsel %vm580, %v572, %v426
        %v582 = vsel %vm580, %v573, %v428
        %v583 = vsel %vm580, %v574, %v430
        %v584 = vsel %vm580, %v575, %v432
        %v585 = vsel %vm580, %v576, %v434
        %v586 = vsel %vm580, %v577, %v436
        %v587 = vsel %vm580, %v578, %v438
        %v588 = vsel %vm580, %v579, %v440
        %vm589 = vcmask 392192
        %v590 = vsel %vm589, %v581, %v458
        %v591 = vsel %vm589, %v582, %v460
        %v592 = vsel %vm589, %v583, %v462
        %v593 = vsel %vm589, %v584, %v464
        %v594 = vsel %vm589, %v585, %v466
        %v595 = vsel %vm589, %v586, %v468
        %v596 = vsel %vm589, %v587, %v470
        %v597 = vsel %vm589, %v588, %v472
        %vm598 = vcmask 457728
        %v599 = vsel %vm598, %v590, %v490
        %v600 = vsel %vm598, %v591, %v492
        %v601 = vsel %vm598, %v592, %v494
        %v602 = vsel %vm598, %v593, %v496
        %v603 = vsel %vm598, %v594, %v498
        %v604 = vsel %vm598, %v595, %v500
        %v605 = vsel %vm598, %v596, %v502
        %v606 = vsel %vm598, %v597, %v504
        %vm607 = vcmask 523264
        %v608 = vsel %vm607, %v599, %v522
        %v609 = vsel %vm607, %v600, %v524
        %v610 = vsel %vm607, %v601, %v526
        %v611 = vsel %vm607, %v602, %v528
        %v612 = vsel %vm607, %v603, %v530
        %v613 = vsel %vm607, %v604, %v532
        %v614 = vsel %vm607, %v605, %v534
        %v615 = vsel %vm607, %v606, %v536
        %v616 = vld [vmem:[#allocation6] sm:$0xff]
        %v617 = vld [vmem:[#allocation6 + $0x8] sm:$0xff]
        %v618 = vld [vmem:[#allocation6 + $0x10] sm:$0xff]
        %v619 = vld [vmem:[#allocation6 + $0x18] sm:$0xff]
        %v620 = vld [vmem:[#allocation6 + $0x20] sm:$0xff]
        %v621 = vld [vmem:[#allocation6 + $0x28] sm:$0xff]
        %v622 = vld [vmem:[#allocation6 + $0x30] sm:$0xff]
        %v623 = vld [vmem:[#allocation6 + $0x38] sm:$0xff]
        %v624 = vld [vmem:[#allocation6 + $0x40] sm:$0xff]
        %vm625 = vcmask 588800
        %v627 = vsel %vm625, %v608, 0
        %v630 = vsel %vm625, %v609, 0
        %v633 = vsel %vm625, %v610, 0
        %v636 = vsel %vm625, %v611, 0
        %v639 = vsel %vm625, %v612, 0
        %v642 = vsel %vm625, %v613, 0
        %v645 = vsel %vm625, %v614, 0
        %v648 = vsel %vm625, %v615, 0
        %650 = vmatprep.subr.mxu0 0.0
        %651 = vmatpush1.msra.mxu0 %v616
        %652 = vmatprep.subr.mxu0 0.0
        %653 = vmatpush1.msra.mxu0 %v617
        %654 = vmatprep.subr.mxu0 0.0
        %655 = vmatpush1.msra.mxu0 %v618
        %656 = vmatprep.subr.mxu0 0.0
        %657 = vmatpush1.msra.mxu0 %v619
        %658 = vmatprep.subr.mxu0 0.0
        %659 = vmatpush1.msra.mxu0 %v620
        %660 = vmatprep.subr.mxu0 0.0
        %661 = vmatpush1.msra.mxu0 %v621
        %662 = vmatprep.subr.mxu0 0.0
        %663 = vmatpush1.msra.mxu0 %v622
        %664 = vmatprep.subr.mxu0 0.0
        %665 = vmatpush1.msra.mxu0 %v623
        %666 = vmatprep.subr.mxu0 0.0
        %667 = vmatpush1.msra.mxu0 %v624
        %668 = vmatprep.subr.mxu0 0.0
        %669 = vmatpush1.msra.mxu0 0.0
        %670 = vmatprep.subr.mxu0 0.0
        %671 = vmatpush1.msra.mxu0 0.0
        %672 = vmatprep.subr.mxu0 0.0
        %673 = vmatpush1.msra.mxu0 0.0
        %674 = vmatprep.subr.mxu0 0.0
        %675 = vmatpush1.msra.mxu0 0.0
        %676 = vmatprep.subr.mxu0 0.0
        %677 = vmatpush1.msra.mxu0 0.0
        %678 = vmatprep.subr.mxu0 0.0
        %679 = vmatpush1.msra.mxu0 0.0
        %680 = vmatprep.subr.mxu0 0.0
        %681 = vmatpush1.msra.mxu0 0.0
        %682 = vmatprep.subr.mxu0 0.0
        %683 = vmatpush1.msra.mxu0 0.0
        %684 = vmatprep.subr.mxu0 0.0
        %685 = vmatpush1.msra.mxu0 0.0
        %686 = vmatprep.subr.mxu0 0.0
        %687 = vmatpush1.msra.mxu0 0.0
        %688 = vmatprep.subr.mxu0 0.0
        %689 = vmatpush1.msra.mxu0 0.0
        %690 = vmatprep.subr.mxu0 0.0
        %691 = vmatpush1.msra.mxu0 0.0
        %692 = vmatprep.subr.mxu0 0.0
        %693 = vmatpush1.msra.mxu0 0.0
        %694 = vmatprep.subr.mxu0 0.0
        %695 = vmatpush1.msra.mxu0 0.0
        %696 = vmatprep.subr.mxu0 0.0
        %697 = vmatpush1.msra.mxu0 0.0
        %698 = vmatprep.subr.mxu0 0.0
        %699 = vmatpush1.msra.mxu0 0.0
        %700 = vmatprep.subr.mxu0 0.0
        %701 = vmatpush1.msra.mxu0 0.0
        %702 = vmatprep.subr.mxu0 0.0
        %703 = vmatpush1.msra.mxu0 0.0
        %704 = vmatprep.subr.mxu0 0.0
        %705 = vmatpush1.msra.mxu0 0.0
        %706 = vmatprep.subr.mxu0 0.0
        %707 = vmatpush1.msra.mxu0 0.0
        %708 = vmatprep.subr.mxu0 0.0
        %709 = vmatpush1.msra.mxu0 0.0
        %710 = vmatprep.subr.mxu0 0.0
        %711 = vmatpush1.msra.mxu0 0.0
        %712 = vmatprep.subr.mxu0 0.0
        %713 = vmatpush1.msra.mxu0 0.0
        %714 = vmatprep.mubr.f32.mxu0 0.0
        %715 = vmatmul.mubr.f32.gmra.mrb[0].mxu0 %v627
        %v716 = vpop.f32.mrb[0].mxu0
        %v717 = vadd.f32 0.0, %v716
        %v718 = vpop.f32.mrb[0].mxu0
        %719 = vmatprep.mubr.f32.mxu0 0.0
        %720 = vmatmul.mubr.f32.gmra.mrb[0].mxu0 %v630
        %v721 = vpop.f32.mrb[0].mxu0
        %v722 = vadd.f32 0.0, %v721
        %v723 = vpop.f32.mrb[0].mxu0
        %724 = vmatprep.mubr.f32.mxu0 0.0
        %725 = vmatmul.mubr.f32.gmra.mrb[0].mxu0 %v633
        %v726 = vpop.f32.mrb[0].mxu0
        %v727 = vadd.f32 0.0, %v726
        %v728 = vpop.f32.mrb[0].mxu0
        %729 = vmatprep.mubr.f32.mxu0 0.0
        %730 = vmatmul.mubr.f32.gmra.mrb[0].mxu0 %v636
        %v731 = vpop.f32.mrb[0].mxu0
        %v732 = vadd.f32 0.0, %v731
        %v733 = vpop.f32.mrb[0].mxu0
        %734 = vmatprep.mubr.f32.mxu0 0.0
        %735 = vmatmul.mubr.f32.gmra.mrb[0].mxu0 %v639
        %v736 = vpop.f32.mrb[0].mxu0
        %v737 = vadd.f32 0.0, %v736
        %v738 = vpop.f32.mrb[0].mxu0
        %739 = vmatprep.mubr.f32.mxu0 0.0
        %740 = vmatmul.mubr.f32.gmra.mrb[0].mxu0 %v642
        %v741 = vpop.f32.mrb[0].mxu0
        %v742 = vadd.f32 0.0, %v741
        %v743 = vpop.f32.mrb[0].mxu0
        %744 = vmatprep.mubr.f32.mxu0 0.0
        %745 = vmatmul.mubr.f32.gmra.mrb[0].mxu0 %v645
        %v746 = vpop.f32.mrb[0].mxu0
        %v747 = vadd.f32 0.0, %v746
        %v748 = vpop.f32.mrb[0].mxu0
        %749 = vmatprep.mubr.f32.mxu0 0.0
        %750 = vmatmul.mubr.f32.gmra.mrb[0].mxu0 %v648
        %v751 = vpop.f32.mrb[0].mxu0
        %v752 = vadd.f32 0.0, %v751
        %v753 = vpop.f32.mrb[0].mxu0
        %754 = vdwg.mxu0
        %755 = vst.msk [vmem:[%s176] sm:$0xff] %vm553, %v717
        %756 = vst.msk [vmem:[%s176 + $0x8] sm:$0xff] %vm553, %v722
        %757 = vst.msk [vmem:[%s176 + $0x10] sm:$0xff] %vm553, %v727
        %758 = vst.msk [vmem:[%s176 + $0x18] sm:$0xff] %vm553, %v732
        %759 = vst.msk [vmem:[%s176 + $0x20] sm:$0xff] %vm553, %v737
        %760 = vst.msk [vmem:[%s176 + $0x28] sm:$0xff] %vm553, %v742
        %761 = vst.msk [vmem:[%s176 + $0x30] sm:$0xff] %vm553, %v747
        %762 = vst.msk [vmem:[%s176 + $0x38] sm:$0xff] %vm553, %v752
        %s763 = sand.u32 %s75, 1
        %s764 = scalar_lea.sflag [#allocation5], %s763
        %s765 = sand.u32 %s75, 1
        %s766 = smul.addr %s765, 64
        %s767 = scalar_lea.vmem [#allocation8], %s766
        // Predicated region
        $region37: #{conv3x3_layer.1} parent=27 // pred_check
          %p768 = pneg %p85
        $region38: #{conv3x3_layer.1} parent=27 // pred_check_branch
          %770 = sbr.rel (%p768) target = $region40
        $region39: #{conv3x3_layer.1} parent=27 // pred_region
          %s772 = ssub.s32 1024, 1024
          %773 = vsyncadd %s764, %s772
          %s774 = smul.addr %s20, 8
          %s775 = smul.addr %s774, 128
          %s776 = scalar_lea.hbm %s2, %s775
          %s777 = sshll.u32 %s767, 4
          %s778 = int_to_ptr.vmem [resolvable:$true] %s777
          %783 = dma.vmem_to_hbm [thread:$0]  %s778, 1024, %s776, %s764, 128, 128, 8
        $region40: #{conv3x3_layer.1} parent=27 // pred_fallthru
          _
      $region28: #{conv3x3_layer.1} parent=5 // pred_fallthru
        _
      %p784 = scmp.le.s32.totalorder 2, %s15
      // Predicated region
      $region41: #{conv3x3_layer.1} parent=5 // pred_check
        %p785 = pneg %p784
      $region42: #{conv3x3_layer.1} parent=5 // pred_check_branch
        %787 = sbr.rel (%p785) target = $region44
      $region43: #{conv3x3_layer.1} parent=5 // pred_region
        %s788 = ssub.s32 %s15, 2
        // Predicated region
        $region45: #{conv3x3_layer.1} parent=43 // pred_check
          %p789 = pneg %p91
        $region46: #{conv3x3_layer.1} parent=43 // pred_check_branch
          %791 = sbr.rel (%p789) target = $region48
        $region47: #{conv3x3_layer.1} parent=43 // pred_region
          %s792 = sand.u32 %s76, 1
          %s793 = scalar_lea.sflag [#allocation5], %s792
          %s794 = sand.u32 %s76, 1
          %s795 = smul.addr %s794, 64
          %s796 = scalar_lea.vmem [#allocation8], %s795
          %797 = dma.done %s793, 1024
        $region48: #{conv3x3_layer.1} parent=43 // pred_fallthru
          _
      $region44: #{conv3x3_layer.1} parent=5 // pred_fallthru
        _
    $region6: #{conv3x3_layer.1} parent=1 // loop_footer
      %s19 = sadd.s32 1, %s15
    $region7: #{conv3x3_layer.1} parent=1 // loop_footer_branch
      %14 = sbr.rel target = $region3
    $region8: #{conv3x3_layer.1} parent=1 // loop_exit
      _
    %798 = vsyncpa [#allocation4], 1
    %s799 = scalar_lea.sflag [#allocation4], 1
    %800 = vsyncpa %s799, 1
    %801 = vsyncpa [#allocation7], 1
    %802 = vsyncpa [#allocation5], 1
    %s803 = scalar_lea.sflag [#allocation5], 1
    %804 = vsyncpa %s803, 1

</llo_original>
